<compile_context>
chip_gen: v7x
topology: tpu7x:2x2x1
jax: 0.10.0
libtpu: 0.0.40
codegen_flags: <defaults>
</compile_context>

<pallas_src>
import math

import jax
import jax.numpy as jnp
from jax import lax
from jax.experimental import pallas as pl
from jax.experimental.pallas import tpu as pltpu

_EPS = 1e-7


def _vmem_capacity_bytes():
    try:
        return int(pltpu.get_tpu_info().vmem_capacity_bytes)
    except Exception:
        return 64 << 20  # conservative fallback (v7x per-TensorCore VMEM)


def _choose_tile(C, HW, pred_esize, tgt_bytes_per_pix):
    """Pick the lane-tile width T (multiple of 128) for the (C, T) pixel blocks."""
    vmem_cap = _vmem_capacity_bytes()
    # Live-VMEM budget: comfortable on every generation (v7x: 64 MiB total / 32 scoped).
    budget = min(vmem_cap // 2, 28 << 20)
    # Live bytes per pixel column:
    #   2 pipeline buffers per input block + ~6 f32 tile-sized temporaries (x, gt, e, p, ...)
    per_pix = 2 * (C * pred_esize + tgt_bytes_per_pix) + 6 * C * 4
    t_budget = budget // per_pix
    # ~2 MiB of logits per block is plenty to amortize per-step overhead / saturate DMA.
    t_target = (2 << 20) // max(C * pred_esize, 1)
    hw_pad = ((HW + 127) // 128) * 128
    T = min(t_budget, t_target, hw_pad)
    T = max((T // 128) * 128, 128)
    return T


def _make_dice_partials_kernel(C, T, HW, n_inner, ragged, labels_mode):
    def kernel(pred_ref, tgt_ref, out_ref):
        s = pl.program_id(0)          # pixel-range split (parallel)
        n = pl.program_id(2)          # pixel tile within split (arbitrary / accumulate)

        x = pred_ref[...].astype(jnp.float32)             # (C, T) logits

        if labels_mode:
            lab = tgt_ref[...].astype(jnp.int32)          # (1, T) class labels
            cls = lax.broadcasted_iota(jnp.int32, (C, T), 0)
            gt = (lab == cls).astype(jnp.float32)         # (C, T) on-the-fly one-hot
        else:
            gt = tgt_ref[...].astype(jnp.float32)         # (C, T) soft / one-hot map

        if ragged:
            # mask the ragged tail (and keep logits finite BEFORE exp)
            lane = lax.broadcasted_iota(jnp.int32, (1, T), 1)
            pix = (s * n_inner + n) * T + lane
            valid = pix < HW                              # (1, T)
            x = jnp.where(valid, x, 0.0)
            gt = jnp.where(valid, gt, 0.0)

        # softmax over the class (sublane) axis
        m = jnp.max(x, axis=0, keepdims=True)             # (1, T)
        e = jnp.exp(x - m)
        z = jnp.sum(e, axis=0, keepdims=True)
        p = e * pl.reciprocal(z, approx=True)             # (C, T)
        if ragged:
            p = jnp.where(valid, p, 0.0)

        # per-tile global reductions (lane reduce; XLU has slack under the mem roofline)
        tp = jnp.sum(p * gt, axis=-1, keepdims=True)      # (C, 1)
        sp = jnp.sum(p, axis=-1, keepdims=True)           # (C, 1)
        sg = jnp.sum(gt, axis=-1, keepdims=True)          # (C, 1)
        part = jnp.stack([tp, sp, sg], axis=0)            # (3, C, 1)

        @pl.when(n == 0)
        def _init():
            out_ref[...] = jnp.zeros_like(out_ref)

        # single stacked RMW into the VMEM-resident accumulator block
        out_ref[...] = out_ref[...] + part

    return kernel


def dice_loss(input_logits, target, eps=_EPS):
    """softmax over classes + sum_{c>=1} (1 - soft F-score(pred_c, gt_c))."""
    B, C, H, W = input_logits.shape
    HW = H * W

    pred = input_logits.reshape(B, C, HW)                 # free reshape, native dtype
    target = jnp.asarray(target)

    labels_mode = target.ndim == input_logits.ndim - 1    # (B, H, W) integer labels
    if labels_mode:
        tgt = target.reshape(B, 1, HW)
        if not jnp.issubdtype(tgt.dtype, jnp.integer):
            tgt = tgt.astype(jnp.int32)
        tgt_bytes_per_pix = tgt.dtype.itemsize
    else:
        tgt = target.reshape(B, C, HW)
        if not jnp.issubdtype(tgt.dtype, jnp.floating):
            tgt = tgt.astype(jnp.float32)
        tgt_bytes_per_pix = C * tgt.dtype.itemsize

    pred_esize = pred.dtype.itemsize
    T = _choose_tile(C, HW, pred_esize, tgt_bytes_per_pix)
    grid_n = pl.cdiv(HW, T)
    ragged = grid_n * T != HW

    # 2-way parallel split of the pixel-tile range (keeps both v7x TCs busy at batch 1;
    # harmless on single-TC chips). Only when it divides evenly -> no fully-OOB tiles.
    n_split = 2 if (grid_n >= 2 and grid_n % 2 == 0) else 1
    n_inner = grid_n // n_split

    kernel = _make_dice_partials_kernel(C, T, HW, n_inner, ragged, labels_mode)

    pred_spec = pl.BlockSpec((None, C, T), lambda s, b, n: (b, 0, s * n_inner + n))
    if labels_mode:
        tgt_spec = pl.BlockSpec((None, 1, T), lambda s, b, n: (b, 0, s * n_inner + n))
    else:
        tgt_spec = pl.BlockSpec((None, C, T), lambda s, b, n: (b, 0, s * n_inner + n))
    out_spec = pl.BlockSpec((None, None, 3, C, 1), lambda s, b, n: (s, b, 0, 0, 0))

    # Generation-aware VMEM limit that also covers the tile-sized f32 temporaries.
    per_pix = 2 * (C * pred_esize + tgt_bytes_per_pix) + 6 * C * 4
    live = per_pix * T + (1 << 20)
    vmem_cap = _vmem_capacity_bytes()
    vmem_limit = int(min(max(live + (4 << 20), 16 << 20), vmem_cap * 3 // 4))

    partials = pl.pallas_call(
        kernel,
        out_shape=jax.ShapeDtypeStruct((n_split, B, 3, C, 1), jnp.float32),
        grid=(n_split, B, n_inner),
        in_specs=[pred_spec, tgt_spec],
        out_specs=out_spec,
        compiler_params=pltpu.CompilerParams(
            dimension_semantics=("parallel", "parallel", "arbitrary"),
            vmem_limit_bytes=vmem_limit,
        ),
    )(pred, tgt)

    # tiny final combine in JAX: global per-class sums -> per-class soft F-score
    sums = jnp.sum(partials, axis=(0, 1, 4))              # (3, C)
    tp = sums[0]
    fp = sums[1] - tp
    fn = sums[2] - tp
    score = (2.0 * tp + eps) / (2.0 * tp + fn + fp + eps)
    # reference loops i in range(1, C) and SUMS (1 - fscore) -- keep that semantics
    return jnp.sum(1.0 - score[1:])


class DiceLoss:
    """Mirror of the PyTorch module. class_weights / threshold are stored but, as in the
    reference forward(), unused."""

    def __init__(self, class_weights=1.0, threshold=None):
        self.class_weights = jnp.asarray(class_weights)
        self.threshold = threshold
        self.name = "DiceLoss"

    def __call__(self, input, target):
        return dice_loss(input, target)


def _ref_loss(logits_f32, target_map):
    """Pure-JAX reference with the same assumed soft F-score."""
    C = logits_f32.shape[1]
    p_ref = jax.nn.softmax(logits_f32, axis=1)
    ref = jnp.float32(0.0)
    for i in range(1, C):
        pr = p_ref[:, i]
        gt = target_map[:, i]
        tp = jnp.sum(pr * gt)
        fp = jnp.sum(pr) - tp
        fn = jnp.sum(gt) - tp
        ref = ref + (1.0 - (2.0 * tp + _EPS) / (2.0 * tp + fn + fp + _EPS))
    return float(ref)


if __name__ == "__main__":
    key = jax.random.PRNGKey(0)
    loss_fn = DiceLoss()

    # --- main test: (B, C, H, W) float map target (module spec), f32 logits ------------
    B, C, H, W = 2, 4, 16, 16
    k1, k2, k3 = jax.random.split(key, 3)
    logits = jax.random.normal(k1, (B, C, H, W), jnp.float32)
    labels = jax.random.randint(k2, (B, H, W), 0, C)
    target = jnp.transpose(jax.nn.one_hot(labels, C, dtype=jnp.float32), (0, 3, 1, 2))

    ref = _ref_loss(logits, target)
    tol = 2e-3 + 2e-2 * abs(ref)

    loss_map = float(jax.block_until_ready(loss_fn(logits, target)))
    assert math.isfinite(loss_map), f"non-finite loss (map): {loss_map}"
    assert abs(loss_map - ref) <= tol, ("map", loss_map, ref)

    # --- integer-label fast path (same semantics for one-hot targets) ------------------
    loss_lab = float(jax.block_until_ready(loss_fn(logits, labels)))
    assert math.isfinite(loss_lab), f"non-finite loss (labels): {loss_lab}"
    assert abs(loss_lab - ref) <= tol, ("labels", loss_lab, ref)

    # --- native bf16 logits (no wrapper cast; kernel upcasts per tile) -----------------
    logits_bf16 = logits.astype(jnp.bfloat16)
    ref_bf = _ref_loss(logits_bf16.astype(jnp.float32), target)
    loss_bf = float(jax.block_until_ready(loss_fn(logits_bf16, target)))
    assert math.isfinite(loss_bf), f"non-finite loss (bf16): {loss_bf}"
    assert abs(loss_bf - ref_bf) <= 2e-3 + 2e-2 * abs(ref_bf), ("bf16", loss_bf, ref_bf)

    # --- ragged spatial size (HW not a multiple of 128): exercises the tail mask -------
    B2, C2, H2, W2 = 1, 3, 9, 15
    k4, k5 = jax.random.split(k3)
    logits2 = jax.random.normal(k4, (B2, C2, H2, W2), jnp.float32)
    labels2 = jax.random.randint(k5, (B2, H2, W2), 0, C2)
    target2 = jnp.transpose(jax.nn.one_hot(labels2, C2, dtype=jnp.float32), (0, 3, 1, 2))
    ref2 = _ref_loss(logits2, target2)
    loss2 = float(jax.block_until_ready(loss_fn(logits2, target2)))
    assert math.isfinite(loss2), f"non-finite loss (ragged): {loss2}"
    assert abs(loss2 - ref2) <= 2e-3 + 2e-2 * abs(ref2), ("ragged", loss2, ref2)

    print("KERNEL_OK")
</pallas_src>

<mosaic_0001>
module attributes {stable_mosaic.version = 11 : i64} {
  func.func @kernel(%arg0: i32, %arg1: i32, %arg2: i32, %arg3: memref<1x4x256xf32, #tpu.memory_space<vmem>>, %arg4: memref<1x4x256xf32, #tpu.memory_space<vmem>>, %arg5: memref<1x1x3x4x1xf32, #tpu.memory_space<vmem>>) attributes {dimension_semantics = [#tpu.dimension_semantics<parallel>, #tpu.dimension_semantics<parallel>, #tpu.dimension_semantics<arbitrary>], iteration_bounds = array<i64: 1, 2, 1>, scalar_prefetch = 0 : i64, scratch_operands = 0 : i64, tpu.core_type = #tpu.core_type<tc>, window_params = [{transform_indices = @transform_0, window_bounds = array<i64: 1, 4, 256>}, {transform_indices = @transform_1, window_bounds = array<i64: 1, 4, 256>}, {transform_indices = @transform_2, window_bounds = array<i64: 1, 1, 3, 4, 1>}]} {
    %c0 = arith.constant 0 : index
    %c0_0 = arith.constant 0 : index
    %c0_1 = arith.constant 0 : index
    %0 = vector.load %arg3[%c0, %c0_0, %c0_1] : memref<1x4x256xf32, #tpu.memory_space<vmem>>, vector<1x4x256xf32>
    %1 = vector.shape_cast %0 : vector<1x4x256xf32> to vector<4x256xf32>
    %c0_2 = arith.constant 0 : index
    %c0_3 = arith.constant 0 : index
    %c0_4 = arith.constant 0 : index
    %2 = vector.load %arg4[%c0_2, %c0_3, %c0_4] : memref<1x4x256xf32, #tpu.memory_space<vmem>>, vector<1x4x256xf32>
    %3 = vector.shape_cast %2 : vector<1x4x256xf32> to vector<4x256xf32>
    %cst = arith.constant dense<0xFF800000> : vector<256xf32>
    %4 = vector.multi_reduction <maximumf>, %1, %cst [0] : vector<4x256xf32> to vector<256xf32>
    %5 = vector.shape_cast %4 : vector<256xf32> to vector<1x256xf32>
    %6 = vector.broadcast %5 : vector<1x256xf32> to vector<4x256xf32>
    %7 = arith.subf %1, %6 : vector<4x256xf32>
    %8 = math.exp %7 : vector<4x256xf32>
    %cst_5 = arith.constant dense<0.000000e+00> : vector<256xf32>
    %9 = vector.multi_reduction <add>, %8, %cst_5 [0] : vector<4x256xf32> to vector<256xf32>
    %10 = vector.shape_cast %9 : vector<256xf32> to vector<1x256xf32>
    %11 = tpu.reciprocal %10 {approx = true} : vector<1x256xf32> -> vector<1x256xf32>
    %12 = vector.broadcast %11 : vector<1x256xf32> to vector<4x256xf32>
    %13 = arith.mulf %8, %12 : vector<4x256xf32>
    %14 = arith.mulf %13, %3 : vector<4x256xf32>
    %cst_6 = arith.constant dense<0.000000e+00> : vector<4xf32>
    %15 = vector.multi_reduction <add>, %14, %cst_6 [1] : vector<4x256xf32> to vector<4xf32>
    %16 = vector.shape_cast %15 : vector<4xf32> to vector<4x1xf32>
    %cst_7 = arith.constant dense<0.000000e+00> : vector<4xf32>
    %17 = vector.multi_reduction <add>, %13, %cst_7 [1] : vector<4x256xf32> to vector<4xf32>
    %18 = vector.shape_cast %17 : vector<4xf32> to vector<4x1xf32>
    %cst_8 = arith.constant dense<0.000000e+00> : vector<4xf32>
    %19 = vector.multi_reduction <add>, %3, %cst_8 [1] : vector<4x256xf32> to vector<4xf32>
    %20 = vector.shape_cast %19 : vector<4xf32> to vector<4x1xf32>
    %21 = vector.shape_cast %16 : vector<4x1xf32> to vector<1x4x1xf32>
    %22 = vector.shape_cast %18 : vector<4x1xf32> to vector<1x4x1xf32>
    %23 = vector.shape_cast %20 : vector<4x1xf32> to vector<1x4x1xf32>
    %24 = tpu.concatenate %21, %22, %23 in 0 : vector<1x4x1xf32>, vector<1x4x1xf32>, vector<1x4x1xf32> -> vector<3x4x1xf32>
    %c0_i32 = arith.constant 0 : i32
    %25 = arith.cmpi eq, %arg2, %c0_i32 : i32
    %26 = arith.extui %25 : i1 to i32
    %c0_i32_9 = arith.constant 0 : i32
    %27 = arith.cmpi ne, %26, %c0_i32_9 : i32
    scf.if %27 {
      %cst_20 = arith.constant 0.000000e+00 : f32
      %34 = vector.broadcast %cst_20 : f32 to vector<3x4x1xf32>
      %c0_21 = arith.constant 0 : index
      %c0_22 = arith.constant 0 : index
      %c0_23 = arith.constant 0 : index
      %c0_24 = arith.constant 0 : index
      %c0_25 = arith.constant 0 : index
      %35 = vector.load %arg5[%c0_21, %c0_22, %c0_23, %c0_24, %c0_25] : memref<1x1x3x4x1xf32, #tpu.memory_space<vmem>>, vector<1x1x3x4x1xf32>
      %36 = vector.shape_cast %35 : vector<1x1x3x4x1xf32> to vector<3x4x1xf32>
      %37 = vector.shape_cast %34 : vector<3x4x1xf32> to vector<1x1x3x4x1xf32>
      tpu.vector_store %arg5[%c0_21, %c0_22, %c0_23, %c0_24, %c0_25], %37 {strides = array<i32>} : memref<1x1x3x4x1xf32, #tpu.memory_space<vmem>>, vector<1x1x3x4x1xf32>,
    } else {
    }
    %c0_10 = arith.constant 0 : index
    %c0_11 = arith.constant 0 : index
    %c0_12 = arith.constant 0 : index
    %c0_13 = arith.constant 0 : index
    %c0_14 = arith.constant 0 : index
    %28 = vector.load %arg5[%c0_10, %c0_11, %c0_12, %c0_13, %c0_14] : memref<1x1x3x4x1xf32, #tpu.memory_space<vmem>>, vector<1x1x3x4x1xf32>
    %29 = vector.shape_cast %28 : vector<1x1x3x4x1xf32> to vector<3x4x1xf32>
    %30 = arith.addf %29, %24 : vector<3x4x1xf32>
    %c0_15 = arith.constant 0 : index
    %c0_16 = arith.constant 0 : index
    %c0_17 = arith.constant 0 : index
    %c0_18 = arith.constant 0 : index
    %c0_19 = arith.constant 0 : index
    %31 = vector.load %arg5[%c0_15, %c0_16, %c0_17, %c0_18, %c0_19] : memref<1x1x3x4x1xf32, #tpu.memory_space<vmem>>, vector<1x1x3x4x1xf32>
    %32 = vector.shape_cast %31 : vector<1x1x3x4x1xf32> to vector<3x4x1xf32>
    %33 = vector.shape_cast %30 : vector<3x4x1xf32> to vector<1x1x3x4x1xf32>
    tpu.vector_store %arg5[%c0_15, %c0_16, %c0_17, %c0_18, %c0_19], %33 {strides = array<i32>} : memref<1x1x3x4x1xf32, #tpu.memory_space<vmem>>, vector<1x1x3x4x1xf32>,
    return
  }
  func.func @transform_0(%arg0: i32, %arg1: i32, %arg2: i32) -> (i32, i32, i32) {
    %c1_i32 = arith.constant 1 : i32
    %0 = arith.muli %arg0, %c1_i32 : i32
    %1 = arith.addi %0, %arg2 : i32
    %c0_i32 = arith.constant 0 : i32
    %c0_i32_0 = arith.constant 0 : i32
    return %arg1, %c0_i32, %1 : i32, i32, i32
  }
  func.func @transform_1(%arg0: i32, %arg1: i32, %arg2: i32) -> (i32, i32, i32) {
    %c1_i32 = arith.constant 1 : i32
    %0 = arith.muli %arg0, %c1_i32 : i32
    %1 = arith.addi %0, %arg2 : i32
    %c0_i32 = arith.constant 0 : i32
    %c0_i32_0 = arith.constant 0 : i32
    return %arg1, %c0_i32, %1 : i32, i32, i32
  }
  func.func @transform_2(%arg0: i32, %arg1: i32, %arg2: i32) -> (i32, i32, i32, i32, i32) {
    %c0_i32 = arith.constant 0 : i32
    %c0_i32_0 = arith.constant 0 : i32
    %c0_i32_1 = arith.constant 0 : i32
    %c0_i32_2 = arith.constant 0 : i32
    return %arg0, %arg1, %c0_i32, %c0_i32_0, %c0_i32_1 : i32, i32, i32, i32, i32
  }
}

</mosaic_0001>

<llo_original>
// kernel: tpu_custom_call.1
$region0: #{tpu_custom_call.1}
  #allocation0 [shape = 'u32[]', space=smem, size = 0x4, offset = 0x4, fixed_abs, tag = 'smem constant byte address 0x4 - core index']
  #allocation1 [shape = 'u32[144,128]{1,0:T(1,128)}', space=vmem, size = 0x12000, scoped, tag = 'internal scratch']
  %s0 = inlined_call_operand.hbm [shape: f32[2,4,256], index: 0, kind: input, shape index: {}]
  %s1 = inlined_call_operand.hbm [shape: f32[2,4,256], index: 1, kind: input, shape index: {}]
  %s2 = inlined_call_operand.vmem [shape: f32[1,2,3,4,1], index: 2, kind: output, shape index: {}]
  %s3 = sld [smem:[#allocation0]]
  $region53: #{tpu_custom_call.1} parent=0
    _
  %s5 = ssub.s32 1, %s3
  %s6 = scalar_select 0, %s5, %s3
  $region1: #{tpu_custom_call.1} parent=0
    #allocation2 [shape = 'u8[8192]{0}', space=vmem, size = 0x2000, scoped, tag = 'input window, operand 0']
    #allocation3 [shape = 's32[2]{0}', space=sflag, size = 0x8, scoped, tag = 'scoped memory for tpu_custom_call.1']
    #allocation4 [shape = 'u8[8192]{0}', space=vmem, size = 0x2000, scoped, tag = 'input window, operand 1']
    #allocation5 [shape = 's32[2]{0}', space=sflag, size = 0x8, scoped, tag = 'scoped memory for tpu_custom_call.1']
    %7 = vsyncpa [#allocation3], 0
    %s8 = scalar_lea.sflag [#allocation3], 1
    %9 = vsyncpa %s8, 0
    %10 = vsyncpa [#allocation5], 0
    %s11 = scalar_lea.sflag [#allocation5], 1
    %12 = vsyncpa %s11, 0
    loop: start=0, step=1, limit=4
    $region2: #{tpu_custom_call.1} parent=1 // loop_pre_header
      _
    $region3: #{tpu_custom_call.1} parent=1 // loop_header
      %s14 = sphi 0, %s18
      %p15 = scmp.ge.s32.totalorder %s14, 4
      %s21 = sphi 0, %s40
      %s22 = sphi 0, %s36
      %s23 = sphi 0, %s32
      %s24 = sphi 0, %s21
      %s25 = sphi 0, %s22
      %s26 = sphi 0, %s23
      %s27 = sphi 0, %s24
      %s28 = sphi 0, %s25
      %s29 = sphi 0, %s26
      %s47 = sphi 0, %s49
      %s50 = sphi 0, %s47
      %s51 = sphi 0, %s50
      %s67 = sphi 0, %s51
      %s77 = sphi 0, %s79
      %s80 = sphi 0, %s77
      %s81 = sphi 0, %s80
      %s97 = sphi 0, %s81
      %s105 = sphi 0, %s107
      %s108 = sphi 0, %s105
      %s109 = sphi 0, %s108
      %s125 = sphi 0, %s109
    $region4: #{tpu_custom_call.1} parent=1 // loop_header_branch
      %17 = sbr.rel (%p15) target = $region8
    $region5: #{tpu_custom_call.1} parent=1 // loop_body
      %s19 = ssub.s32 %s14, 1
      %s20 = ssub.s32 %s14, 2
      %s30 = sadd.s32 1, %s23
      %p31 = scmp.ge.s32.totalorder %s30, 1
      %s32 = scalar_select %p31, 0, %s30
      %s33 = sadd.s32 1, %s22
      %s34 = scalar_select %p31, %s33, %s22
      %p35 = scmp.ge.s32.totalorder %s34, 2
      %s36 = scalar_select %p35, 0, %s34
      %s37 = sadd.s32 1, %s21
      %s38 = scalar_select %p35, %s37, %s21
      %p39 = scmp.ge.s32.totalorder %s38, 1
      %s40 = scalar_select %p39, 0, %s38
      %s41 = sadd.s32 %s21, %s23
      %s42 = sadd.s32 %s40, %s32
      %s43 = ssub.s32 %s22, %s36
      %s44 = ssub.s32 %s41, %s42
      %s45 = sor.u32 %s43, %s44
      %p46 = scmp.eq.s32.totalorder %s45, 0
      %s48 = sadd.s32 %s47, 1
      %s49 = scalar_select %p46, %s47, %s48
      %p52 = pneg %p46
      %p53 = scmp.eq.s32.totalorder %s14, 1
      %p54 = por %p52, %p53
      %p55 = scmp.ne.s32.totalorder %s47, %s50
      %p56 = scmp.eq.s32.totalorder %s14, 0
      %p57 = por %p55, %p56
      %p58 = scmp.ne.s32.totalorder %s47, %s50
      %p59 = scmp.eq.s32.totalorder %s19, 1
      %p60 = por %p58, %p59
      %p61 = scmp.ne.s32.totalorder %s50, %s51
      %p62 = scmp.eq.s32.totalorder %s19, 0
      %p63 = por %p61, %p62
      %p64 = scmp.ne.s32.totalorder %s50, %s51
      %p65 = scmp.eq.s32.totalorder %s20, 1
      %p66 = por %p64, %p65
      %p68 = scmp.ne.s32.totalorder %s51, %s67
      %p69 = scmp.eq.s32.totalorder %s20, 0
      %p70 = por %p68, %p69
      %s71 = sadd.s32 %s21, %s23
      %s72 = sadd.s32 %s40, %s32
      %s73 = ssub.s32 %s22, %s36
      %s74 = ssub.s32 %s71, %s72
      %s75 = sor.u32 %s73, %s74
      %p76 = scmp.eq.s32.totalorder %s75, 0
      %s78 = sadd.s32 %s77, 1
      %s79 = scalar_select %p76, %s77, %s78
      %p82 = pneg %p76
      %p83 = scmp.eq.s32.totalorder %s14, 1
      %p84 = por %p82, %p83
      %p85 = scmp.ne.s32.totalorder %s77, %s80
      %p86 = scmp.eq.s32.totalorder %s14, 0
      %p87 = por %p85, %p86
      %p88 = scmp.ne.s32.totalorder %s77, %s80
      %p89 = scmp.eq.s32.totalorder %s19, 1
      %p90 = por %p88, %p89
      %p91 = scmp.ne.s32.totalorder %s80, %s81
      %p92 = scmp.eq.s32.totalorder %s19, 0
      %p93 = por %p91, %p92
      %p94 = scmp.ne.s32.totalorder %s80, %s81
      %p95 = scmp.eq.s32.totalorder %s20, 1
      %p96 = por %p94, %p95
      %p98 = scmp.ne.s32.totalorder %s81, %s97
      %p99 = scmp.eq.s32.totalorder %s20, 0
      %p100 = por %p98, %p99
      %s101 = ssub.s32 %s21, %s40
      %s102 = ssub.s32 %s22, %s36
      %s103 = sor.u32 %s101, %s102
      %p104 = scmp.eq.s32.totalorder %s103, 0
      %s106 = sadd.s32 %s105, 1
      %s107 = scalar_select %p104, %s105, %s106
      %p110 = pneg %p104
      %p111 = scmp.eq.s32.totalorder %s14, 1
      %p112 = por %p110, %p111
      %p113 = scmp.ne.s32.totalorder %s105, %s108
      %p114 = scmp.eq.s32.totalorder %s14, 0
      %p115 = por %p113, %p114
      %p116 = scmp.ne.s32.totalorder %s105, %s108
      %p117 = scmp.eq.s32.totalorder %s19, 1
      %p118 = por %p116, %p117
      %p119 = scmp.ne.s32.totalorder %s108, %s109
      %p120 = scmp.eq.s32.totalorder %s19, 0
      %p121 = por %p119, %p120
      %p122 = scmp.ne.s32.totalorder %s108, %s109
      %p123 = scmp.eq.s32.totalorder %s20, 1
      %p124 = por %p122, %p123
      %p126 = scmp.ne.s32.totalorder %s109, %s125
      %p127 = scmp.eq.s32.totalorder %s20, 0
      %p128 = por %p126, %p127
      %p129 = scmp.le.s32.totalorder 1, %s14
      %p130 = scmp.lt.s32.totalorder %s14, 3
      %p131 = pnand %p129, %p130
      %p132 = pneg %p131
      // Predicated region
      $region9: #{tpu_custom_call.1} parent=5 // pred_check
        _
      $region10: #{tpu_custom_call.1} parent=5 // pred_check_branch
        %134 = sbr.rel (%p131) target = $region12
      $region11: #{tpu_custom_call.1} parent=5 // pred_region
        %s135 = ssub.s32 %s14, 1
      $region12: #{tpu_custom_call.1} parent=5 // pred_fallthru
        _
      %p136 = scmp.lt.s32.totalorder %s14, 2
      // Predicated region
      $region13: #{tpu_custom_call.1} parent=5 // pred_check
        %p137 = pneg %p136
      $region14: #{tpu_custom_call.1} parent=5 // pred_check_branch
        %139 = sbr.rel (%p137) target = $region16
      $region15: #{tpu_custom_call.1} parent=5 // pred_region
        // Predicated region
        $region17: #{tpu_custom_call.1} parent=15 // pred_check
          %p140 = pneg %p57
        $region18: #{tpu_custom_call.1} parent=15 // pred_check_branch
          %142 = sbr.rel (%p140) target = $region20
        $region19: #{tpu_custom_call.1} parent=15 // pred_region
          %s143 = sand.u32 %s47, 1
          %s144 = scalar_lea.sflag [#allocation3], %s143
          %s145 = sand.u32 %s47, 1
          %s146 = smul.addr %s145, 8
          %s147 = scalar_lea.vmem [#allocation2], %s146
          %s148 = sadd.s32 %s21, %s23
          %s149 = smul.u32 2, %s148
          %s151 = ssub.s32 128, 128
          %152 = vsyncadd %s144, %s151
          %s153 = smul.addr %s22, 2
          %s154 = sadd.s32 %s149, %s153
          %s155 = smul.addr %s154, 64
          %s156 = scalar_lea.hbm %s0, %s155
          %s158 = sshll.u32 %s147, 4
          %s159 = int_to_ptr.vmem [resolvable:$true] %s158
          %161 = dma.hbm_to_vmem [thread:$0]  %s156, 128, %s159, %s144
        $region20: #{tpu_custom_call.1} parent=15 // pred_fallthru
          _
        // Predicated region
        $region21: #{tpu_custom_call.1} parent=15 // pred_check
          %p162 = pneg %p87
        $region22: #{tpu_custom_call.1} parent=15 // pred_check_branch
          %164 = sbr.rel (%p162) target = $region24
        $region23: #{tpu_custom_call.1} parent=15 // pred_region
          %s165 = sand.u32 %s77, 1
          %s166 = scalar_lea.sflag [#allocation5], %s165
          %s167 = sand.u32 %s77, 1
          %s168 = smul.addr %s167, 8
          %s169 = scalar_lea.vmem [#allocation4], %s168
          %s170 = sadd.s32 %s21, %s23
          %s171 = smul.u32 2, %s170
          %s173 = ssub.s32 128, 128
          %174 = vsyncadd %s166, %s173
          %s175 = smul.addr %s22, 2
          %s176 = sadd.s32 %s171, %s175
          %s177 = smul.addr %s176, 64
          %s178 = scalar_lea.hbm %s1, %s177
          %s180 = sshll.u32 %s169, 4
          %s181 = int_to_ptr.vmem [resolvable:$true] %s180
          %183 = dma.hbm_to_vmem [thread:$0]  %s178, 128, %s181, %s166
        $region24: #{tpu_custom_call.1} parent=15 // pred_fallthru
          _
      $region16: #{tpu_custom_call.1} parent=5 // pred_fallthru
        _
      %p184 = scmp.le.s32.totalorder 1, %s14
      %p185 = scmp.lt.s32.totalorder %s14, 3
      %p186 = pnand %p184, %p185
      %p187 = pneg %p186
      // Predicated region
      $region25: #{tpu_custom_call.1} parent=5 // pred_check
        _
      $region26: #{tpu_custom_call.1} parent=5 // pred_check_branch
        %189 = sbr.rel (%p186) target = $region28
      $region27: #{tpu_custom_call.1} parent=5 // pred_region
        %s190 = ssub.s32 %s14, 1
        %s191 = sand.u32 %s50, 1
        %s192 = scalar_lea.sflag [#allocation3], %s191
        %s193 = sand.u32 %s50, 1
        %s194 = smul.addr %s193, 8
        %s195 = scalar_lea.vmem [#allocation2], %s194
        // Predicated region
        $region29: #{tpu_custom_call.1} parent=27 // pred_check
          %p196 = pneg %p63
        $region30: #{tpu_custom_call.1} parent=27 // pred_check_branch
          %198 = sbr.rel (%p196) target = $region32
        $region31: #{tpu_custom_call.1} parent=27 // pred_region
          %199 = dma.done %s192, 128
        $region32: #{tpu_custom_call.1} parent=27 // pred_fallthru
          _
        %s200 = sand.u32 %s80, 1
        %s201 = scalar_lea.sflag [#allocation5], %s200
        %s202 = sand.u32 %s80, 1
        %s203 = smul.addr %s202, 8
        %s204 = scalar_lea.vmem [#allocation4], %s203
        // Predicated region
        $region33: #{tpu_custom_call.1} parent=27 // pred_check
          %p205 = pneg %p93
        $region34: #{tpu_custom_call.1} parent=27 // pred_check_branch
          %207 = sbr.rel (%p205) target = $region36
        $region35: #{tpu_custom_call.1} parent=27 // pred_region
          %208 = dma.done %s201, 128
        $region36: #{tpu_custom_call.1} parent=27 // pred_fallthru
          _
        %s209 = sand.u32 %s50, 1
        %s210 = scalar_lea.sflag [#allocation3], %s209
        %s211 = sand.u32 %s50, 1
        %s212 = smul.addr %s211, 8
        %s213 = scalar_lea.vmem [#allocation2], %s212
        %p214 = pneg %p63
        %p215 = pneg %p60
        %s216 = sand.u32 %s80, 1
        %s217 = scalar_lea.sflag [#allocation5], %s216
        %s218 = sand.u32 %s80, 1
        %s219 = smul.addr %s218, 8
        %s220 = scalar_lea.vmem [#allocation4], %s219
        %p221 = pneg %p93
        %p222 = pneg %p90
        %p223 = pneg %p121
        %p224 = pneg %p118
        %p225 = scmp.lt.s32.totalorder %s24, 0
        %s226 = scalar_select %p225, %s24, 0
        %p227 = scmp.lt.s32.totalorder %s25, 1
        %s228 = scalar_select %p227, %s25, 1
        %s229 = smul.addr %s228, 3
        %s230 = smul.addr %s226, 6
        %s231 = sadd.s32 %s229, %s230
        %s232 = smul.addr %s231, 4
        %s233 = scalar_lea.vmem %s2, %s232
        %s234 = sadd.s32 %s24, %s26
        %s235 = smul.u32 2, %s234
        %s236 = sadd.s32 %s24, %s26
        %s237 = smul.u32 2, %s236
        %p238 = scmp.lt.s32.totalorder %s24, 0
        %s239 = scalar_select %p238, %s24, 0
        %p240 = scmp.lt.s32.totalorder %s25, 1
        %s241 = scalar_select %p240, %s25, 1
        %s242 = smul.addr %s241, 3
        %s243 = smul.addr %s239, 6
        %s244 = sadd.s32 %s242, %s243
        %s245 = smul.addr %s244, 4
        %s246 = scalar_lea.vmem %s2, %s245
        %v247 = vld [vmem:[%s195] sm:$0xff]
        %v248 = vld [vmem:[%s204] sm:$0xff]
        %v250 = vcombine.high %v247, %v247
        %vm252 = vcmask 1043456
        %v253 = vsel %vm252, %v247, -inf
        %v254 = vrot.slane %v253, 4
        %v255 = vmax.f32 %v253, %v254
        %v256 = vrot.slane %v255, 2
        %v257 = vmax.f32 %v255, %v256
        %v258 = vrot.slane %v257, 1
        %v259 = vmax.f32 %v257, %v258
        %v260 = vsel %vm252, %v250, -inf
        %v261 = vrot.slane %v260, 4
        %v262 = vmax.f32 %v260, %v261
        %v263 = vrot.slane %v262, 2
        %v264 = vmax.f32 %v262, %v263
        %v265 = vrot.slane %v264, 1
        %v266 = vmax.f32 %v264, %v265
        %v269 = vcombine.low %v259, %v266
        %v271 = vsub.f32 %v247, %v269
        %v272 = vmul.f32 %v271, 1.442695
        %v273 = vpow.pop %v272
        %v275 = vcombine.high %v273, %v273
        %v277 = vsel %vm252, %v273, 0.0
        %v278 = vrot.slane %v277, 4
        %v279 = vadd.f32 %v277, %v278
        %v280 = vrot.slane %v279, 2
        %v281 = vadd.f32 %v279, %v280
        %v282 = vrot.slane %v281, 1
        %v283 = vadd.f32 %v281, %v282
        %v284 = vsel %vm252, %v275, 0.0
        %v285 = vrot.slane %v284, 4
        %v286 = vadd.f32 %v284, %v285
        %v287 = vrot.slane %v286, 2
        %v288 = vadd.f32 %v286, %v287
        %v289 = vrot.slane %v288, 1
        %v290 = vadd.f32 %v288, %v289
        %v291 = vrcp.pop %v283
        %v292 = vrcp.pop %v290
        %v295 = vcombine.low %v291, %v292
        %v297 = vmul.f32 %v273, %v295
        %v298 = vmul.f32 %v297, %v248
        %v300 = vcombine.high %v298, %v298
        %v302 = vsel %vm252, %v298, 0.0
        %v303 = vsel %vm252, %v300, 0.0
        %v304 = vadd.f32 %v302, %v303
        %305 = vadd.xlane.f32.xlu0 %v304
        %v306 = vpop.xlane.xlu0 %305
        %v308 = vcombine.high %v297, %v297
        %v310 = vsel %vm252, %v297, 0.0
        %v311 = vsel %vm252, %v308, 0.0
        %v312 = vadd.f32 %v310, %v311
        %313 = vadd.xlane.f32.xlu0 %v312
        %v314 = vpop.xlane.xlu0 %313
        %v316 = vcombine.high %v248, %v248
        %v318 = vsel %vm252, %v248, 0.0
        %v319 = vsel %vm252, %v316, 0.0
        %v320 = vadd.f32 %v318, %v319
        %321 = vadd.xlane.f32.xlu0 %v320
        %v322 = vpop.xlane.xlu0 %321
        %p323 = scmp.eq.s32.totalorder %s26, 0
        // Predicated region
        $region37: #{tpu_custom_call.1} parent=27 // pred_check
          %p324 = pneg %p323
        $region38: #{tpu_custom_call.1} parent=27 // pred_check_branch
          %326 = sbr.rel (%p324) target = $region40
        $region39: #{tpu_custom_call.1} parent=27 // pred_region
          %vm327 = vcmask 3072
          %328 = vst.msk [vmem:[%s246] sm:$0xf] %vm327, 0.0
          %329 = vst.msk [vmem:[%s246 + $0x4] sm:$0xf] %vm327, 0.0
          %330 = vst.msk [vmem:[%s246 + $0x8] sm:$0xf] %vm327, 0.0
        $region40: #{tpu_custom_call.1} parent=27 // pred_fallthru
          _
        %v331 = vld [vmem:[%s246] sm:$0xf]
        %v332 = vld [vmem:[%s246 + $0x4] sm:$0xf]
        %v333 = vld [vmem:[%s246 + $0x8] sm:$0xf]
        %v334 = vadd.f32 %v331, %v306
        %v335 = vadd.f32 %v332, %v314
        %v336 = vadd.f32 %v333, %v322
        %vm337 = vcmask 3072
        %338 = vst.msk [vmem:[%s246] sm:$0xf] %vm337, %v334
        %339 = vst.msk [vmem:[%s246 + $0x4] sm:$0xf] %vm337, %v335
        %340 = vst.msk [vmem:[%s246 + $0x8] sm:$0xf] %vm337, %v336
        %p341 = scmp.lt.s32.totalorder %s24, 0
        %s342 = scalar_select %p341, %s24, 0
        %p343 = scmp.lt.s32.totalorder %s25, 1
        %s344 = scalar_select %p343, %s25, 1
        %s345 = smul.addr %s344, 3
        %s346 = smul.addr %s342, 6
        %s347 = sadd.s32 %s345, %s346
        %s348 = smul.addr %s347, 4
        %s349 = scalar_lea.vmem %s2, %s348
        // Predicated region
        $region41: #{tpu_custom_call.1} parent=27 // pred_check
          %p350 = pneg %p118
        $region42: #{tpu_custom_call.1} parent=27 // pred_check_branch
          %352 = sbr.rel (%p350) target = $region44
        $region43: #{tpu_custom_call.1} parent=27 // pred_region
          _
        $region44: #{tpu_custom_call.1} parent=27 // pred_fallthru
          _
      $region28: #{tpu_custom_call.1} parent=5 // pred_fallthru
        _
      %p353 = scmp.le.s32.totalorder 2, %s14
      // Predicated region
      $region45: #{tpu_custom_call.1} parent=5 // pred_check
        %p354 = pneg %p353
      $region46: #{tpu_custom_call.1} parent=5 // pred_check_branch
        %356 = sbr.rel (%p354) target = $region48
      $region47: #{tpu_custom_call.1} parent=5 // pred_region
        %s357 = ssub.s32 %s14, 2
        // Predicated region
        $region49: #{tpu_custom_call.1} parent=47 // pred_check
          %p358 = pneg %p124
        $region50: #{tpu_custom_call.1} parent=47 // pred_check_branch
          %360 = sbr.rel (%p358) target = $region52
        $region51: #{tpu_custom_call.1} parent=47 // pred_region
          %p361 = scmp.lt.s32.totalorder %s27, 0
          %s362 = scalar_select %p361, %s27, 0
          %p363 = scmp.lt.s32.totalorder %s28, 1
          %s364 = scalar_select %p363, %s28, 1
          %s365 = smul.addr %s364, 3
          %s366 = smul.addr %s362, 6
          %s367 = sadd.s32 %s365, %s366
          %s368 = smul.addr %s367, 4
          %s369 = scalar_lea.vmem %s2, %s368
        $region52: #{tpu_custom_call.1} parent=47 // pred_fallthru
          _
      $region48: #{tpu_custom_call.1} parent=5 // pred_fallthru
        _
    $region6: #{tpu_custom_call.1} parent=1 // loop_footer
      %s18 = sadd.s32 1, %s14
    $region7: #{tpu_custom_call.1} parent=1 // loop_footer_branch
      %13 = sbr.rel target = $region3
    $region8: #{tpu_custom_call.1} parent=1 // loop_exit
      _
    %370 = vsyncpa [#allocation3], 1
    %s371 = scalar_lea.sflag [#allocation3], 1
    %372 = vsyncpa %s371, 1
    %373 = vsyncpa [#allocation5], 1
    %s374 = scalar_lea.sflag [#allocation5], 1
    %375 = vsyncpa %s374, 1

</llo_original>
